<compile_context>
chip_gen: v7x
topology: tpu7x:2x2x1
jax: 0.10.0
libtpu: 0.0.40
codegen_flags: <defaults>
</compile_context>

<pallas_src>
import functools

import jax
import jax.numpy as jnp
from jax.experimental import pallas as pl
from jax.experimental.pallas import tpu as pltpu


def _round_up(v, m):
    return (v + m - 1) // m * m


def _temporal_block_kernel(*refs, K, D, P, P_pad, TL, C_in_p, C_out_p,
                           has_downsample):
    """relu( conv2(relu(conv1(x))) + residual(x) ) for one (batch, L-tile).

    refs (in order):
      x_ref   : (1, C_in_p, TL)          current input tile (compute dtype)
      w1_ref  : (K, C_out_p, C_in_p)     conv1 taps
      b1_ref  : (C_out_p, 1)             f32
      w2_ref  : (K, C_out_p, C_out_p)    conv2 taps
      b2_ref  : (C_out_p, 1)             f32
      [wd_ref]: (C_out_p, C_in_p)        1x1 downsample (only if present)
      [bd_ref]: (C_out_p, 1)
      out_ref : (1, C_out_p, TL)
      xs_ref  : (C_in_p, P_pad+TL)  scratch  [carried left context | x tile]
      hs_ref  : (C_out_p, P_pad+TL) scratch  [carried left context | h1 tile]
    """
    if has_downsample:
        (x_ref, w1_ref, b1_ref, w2_ref, b2_ref, wd_ref, bd_ref, out_ref,
         xs_ref, hs_ref) = refs
    else:
        (x_ref, w1_ref, b1_ref, w2_ref, b2_ref, out_ref,
         xs_ref, hs_ref) = refs

    j = pl.program_id(1)
    poff = P_pad - P  # carried context lives at [poff, P_pad); tile at [P_pad, P_pad+TL)

    # ---- carry the causal left context (pad/chomp) across L tiles ----------
    if P > 0:
        @pl.when(j == 0)
        def _():  # new batch element: causal zero padding
            xs_ref[:, :P_pad] = jnp.zeros((C_in_p, P_pad), xs_ref.dtype)
            hs_ref[:, :P_pad] = jnp.zeros((C_out_p, P_pad), hs_ref.dtype)

        @pl.when(j > 0)
        def _():  # shift in the tail of the previous tile (TL >= P is enforced)
            xs_ref[:, poff:P_pad] = xs_ref[:, poff + TL:poff + TL + P]
            hs_ref[:, poff:P_pad] = hs_ref[:, poff + TL:poff + TL + P]

    # stage current input tile after the carried context (128-lane aligned)
    xs_ref[:, P_pad:] = x_ref[0].astype(xs_ref.dtype)

    # ---- conv1: K shifted dots, f32 accumulation (no im2col) ---------------
    acc1 = jnp.dot(w1_ref[0], xs_ref[:, poff:poff + TL],
                   preferred_element_type=jnp.float32)
    for t in range(1, K):  # K is small & static -> unrolled
        acc1 = acc1 + jnp.dot(w1_ref[t],
                              xs_ref[:, poff + t * D:poff + t * D + TL],
                              preferred_element_type=jnp.float32)
    h1 = jnp.maximum(acc1 + b1_ref[...], 0.0)

    # stage h1 (post-ReLU) for conv2's causal window
    hs_ref[:, P_pad:] = h1.astype(hs_ref.dtype)

    # ---- conv2: K shifted dots ----------------------------------------------
    acc2 = jnp.dot(w2_ref[0], hs_ref[:, poff:poff + TL],
                   preferred_element_type=jnp.float32)
    for t in range(1, K):
        acc2 = acc2 + jnp.dot(w2_ref[t],
                              hs_ref[:, poff + t * D:poff + t * D + TL],
                              preferred_element_type=jnp.float32)
    h2 = jnp.maximum(acc2 + b2_ref[...], 0.0)

    # ---- residual branch (read late to keep its live range short) ----------
    if has_downsample:
        res = jnp.dot(wd_ref[...], x_ref[0],
                      preferred_element_type=jnp.float32) + bd_ref[...]
    else:
        res = x_ref[0].astype(jnp.float32)

    # ---- residual add + final ReLU ------------------------------------------
    out_ref[0] = jnp.maximum(h2 + res, 0.0).astype(out_ref.dtype)


def temporal_block(x, params, *, kernel_size, dilation, tile_l=512,
                   compute_dtype=jnp.bfloat16):
    """x: (N, C_in, L) float32; params in PyTorch layout:
       w1 (C_out, C_in, K), b1 (C_out,), w2 (C_out, C_out, K), b2 (C_out,),
       wd (C_out, C_in, 1) or None, bd (C_out,) or None.
       stride=1, padding=(K-1)*dilation (standard TCN: chomp restores L).

       compute_dtype: dtype fed to the MXU (weights + staged activations).
       Defaults to bfloat16 (native MXU dtype on all TPU generations);
       accumulation, bias, ReLU and the residual add stay in float32.
    """
    w1, b1, w2, b2, wd, bd = params
    N, C_in, L = x.shape
    K, D = kernel_size, dilation
    P = (K - 1) * D                       # padding == chomp size (causal context)
    C_out = w1.shape[0]
    has_downsample = wd is not None
    if not has_downsample:
        assert C_in == C_out, "identity residual requires n_inputs == n_outputs"

    compute_dtype = jnp.dtype(compute_dtype)
    itemsize = compute_dtype.itemsize
    out_itemsize = jnp.dtype(x.dtype).itemsize

    # ---- alignment: sublane packing of the compute dtype (f32:8, bf16:16) --
    sub = 8 * (4 // itemsize)
    C_in_p = _round_up(C_in, sub)
    C_out_p = _round_up(C_out, sub)
    P_pad = _round_up(P, 128) if P > 0 else 0   # lane-aligned staging offset

    # ---- L tiling: lane-dense, big tiles (>=256 lanes, multiple of 256) ----
    L_128 = _round_up(L, 128)
    TL = min(_round_up(max(tile_l, 256), 256), L_128)
    if TL < L_128 and P > 0:
        TL = max(TL, _round_up(P, 128))   # keep the carry copy non-overlapping
    TL = min(TL, L_128)

    def _vmem_bytes(tl):
        w = (K * C_out_p * C_in_p + K * C_out_p * C_out_p) * itemsize
        if has_downsample:
            w += C_out_p * C_in_p * itemsize
        b = 3 * C_out_p * 4
        tiles = C_in_p * tl * itemsize + C_out_p * tl * out_itemsize
        scratch = (C_in_p + C_out_p) * (P_pad + tl) * itemsize
        return 2 * (w + b + tiles) + scratch   # 2x: pipeline double-buffering

    # shrink TL only if the VMEM budget demands it (never below 256 or P)
    while _vmem_bytes(TL) > (40 << 20) and TL - 256 >= max(256, P):
        TL -= 256

    L_pad = _round_up(L, TL)
    num_tiles = L_pad // TL

    # ---- host-side glue: pad + cast activations, weights to (K, Cout, Cin) -
    xpd = jnp.pad(x, ((0, 0), (0, C_in_p - C_in),
                      (0, L_pad - L))).astype(compute_dtype)

    w1p = jnp.pad(w1, ((0, C_out_p - C_out), (0, C_in_p - C_in), (0, 0)))
    w1k = jnp.transpose(w1p, (2, 0, 1)).astype(compute_dtype)   # (K, Cout_p, Cin_p)
    w2p = jnp.pad(w2, ((0, C_out_p - C_out), (0, C_out_p - C_out), (0, 0)))
    w2k = jnp.transpose(w2p, (2, 0, 1)).astype(compute_dtype)   # (K, Cout_p, Cout_p)
    b1p = jnp.pad(b1, (0, C_out_p - C_out)).reshape(C_out_p, 1).astype(jnp.float32)
    b2p = jnp.pad(b2, (0, C_out_p - C_out)).reshape(C_out_p, 1).astype(jnp.float32)

    inputs = [xpd, w1k, b1p, w2k, b2p]
    in_specs = [
        pl.BlockSpec((1, C_in_p, TL), lambda n, j: (n, 0, j)),
        pl.BlockSpec((K, C_out_p, C_in_p), lambda n, j: (0, 0, 0)),
        pl.BlockSpec((C_out_p, 1), lambda n, j: (0, 0)),
        pl.BlockSpec((K, C_out_p, C_out_p), lambda n, j: (0, 0, 0)),
        pl.BlockSpec((C_out_p, 1), lambda n, j: (0, 0)),
    ]
    if has_downsample:
        wdk = jnp.pad(wd[:, :, 0], ((0, C_out_p - C_out),
                                    (0, C_in_p - C_in))).astype(compute_dtype)
        bdp = jnp.pad(bd, (0, C_out_p - C_out)).reshape(C_out_p, 1).astype(jnp.float32)
        inputs += [wdk, bdp]
        in_specs += [pl.BlockSpec((C_out_p, C_in_p), lambda n, j: (0, 0)),
                     pl.BlockSpec((C_out_p, 1), lambda n, j: (0, 0))]

    scratch_shapes = [
        pltpu.VMEM((C_in_p, P_pad + TL), compute_dtype),    # xs: carried ctx | x
        pltpu.VMEM((C_out_p, P_pad + TL), compute_dtype),   # hs: carried ctx | h1
    ]

    kernel = functools.partial(
        _temporal_block_kernel, K=K, D=D, P=P, P_pad=P_pad, TL=TL,
        C_in_p=C_in_p, C_out_p=C_out_p, has_downsample=has_downsample)

    vmem_limit = int(min(64 << 20, max(32 << 20, _vmem_bytes(TL) + (8 << 20))))

    out = pl.pallas_call(
        kernel,
        out_shape=jax.ShapeDtypeStruct((N, C_out_p, L_pad), x.dtype),
        grid_spec=pltpu.PrefetchScalarGridSpec(
            num_scalar_prefetch=0,
            grid=(N, num_tiles),            # L-tile axis is sequential (carry)
            in_specs=in_specs,
            out_specs=pl.BlockSpec((1, C_out_p, TL), lambda n, j: (n, 0, j)),
            scratch_shapes=scratch_shapes,
        ),
        compiler_params=pltpu.CompilerParams(
            dimension_semantics=("parallel", "arbitrary"),
            vmem_limit_bytes=vmem_limit),
    )(*inputs)

    return out[:, :C_out, :L]


def make_params(key, n_inputs, n_outputs, kernel_size):
    """Deterministic synthetic parameters, applying weight_norm semantics:
       w = g * v / ||v||, norm taken over (in_channels, kernel) per out channel."""
    ks = jax.random.split(key, 8)

    def wn_weight(kv, kg, shape):
        v = 0.05 * jax.random.normal(kv, shape, jnp.float32)
        g = 1.0 + 0.1 * jax.random.normal(kg, (shape[0], 1, 1), jnp.float32)
        return g * v / jnp.sqrt(jnp.sum(v * v, axis=(1, 2), keepdims=True))

    w1 = wn_weight(ks[0], ks[1], (n_outputs, n_inputs, kernel_size))
    b1 = 0.01 * jax.random.normal(ks[2], (n_outputs,), jnp.float32)
    w2 = wn_weight(ks[3], ks[4], (n_outputs, n_outputs, kernel_size))
    b2 = 0.01 * jax.random.normal(ks[5], (n_outputs,), jnp.float32)
    if n_inputs != n_outputs:
        wd = 0.01 * jax.random.normal(ks[6], (n_outputs, n_inputs, 1), jnp.float32)
        bd = 0.01 * jax.random.normal(ks[7], (n_outputs,), jnp.float32)
    else:
        wd, bd = None, None
    return w1, b1, w2, b2, wd, bd


def reference(x, w1, b1, w2, b2, wd, bd, *, kernel_size, dilation):
    """Pure-JAX reference of the PyTorch forward (eval mode)."""
    K, D = kernel_size, dilation
    P = (K - 1) * D
    hi = jax.lax.Precision.HIGHEST

    def causal_conv(inp, w, b):
        L = inp.shape[-1]
        xp = jnp.pad(inp, ((0, 0), (0, 0), (P, 0)))
        out = jnp.zeros((inp.shape[0], w.shape[0], L), jnp.float32)
        for t in range(K):
            out = out + jnp.einsum('oc,ncl->nol', w[:, :, t],
                                   xp[:, :, t * D: t * D + L], precision=hi)
        return out + b[None, :, None]

    h1 = jax.nn.relu(causal_conv(x, w1, b1))
    h2 = jax.nn.relu(causal_conv(h1, w2, b2))
    if wd is not None:
        res = jnp.einsum('oc,ncl->nol', wd[:, :, 0], x, precision=hi) + bd[None, :, None]
    else:
        res = x
    return jax.nn.relu(h2 + res)


if __name__ == "__main__":
    key = jax.random.PRNGKey(0)
    kx1, kp1, kx2, kp2 = jax.random.split(key, 4)

    # Config 1: n_inputs != n_outputs -> 1x1 downsample residual, single L tile.
    N, C_in, C_out, L = 2, 4, 8, 16
    K, D = 3, 2                       # padding = chomp = (K-1)*D = 4
    x = jax.random.normal(kx1, (N, C_in, L), jnp.float32)
    params = make_params(kp1, C_in, C_out, K)
    ref = reference(x, *params, kernel_size=K, dilation=D)

    # f32 compute path: tight correctness check of the kernel logic.
    out_f32 = jax.block_until_ready(
        temporal_block(x, params, kernel_size=K, dilation=D,
                       compute_dtype=jnp.float32))
    assert out_f32.shape == (N, C_out, L), out_f32.shape
    assert jnp.allclose(out_f32, ref, atol=1e-4, rtol=1e-4), "f32 mismatch (cfg 1)"

    # default bf16 MXU path: bf16-aware relative tolerance.
    out_bf = jax.block_until_ready(
        temporal_block(x, params, kernel_size=K, dilation=D))
    assert out_bf.shape == (N, C_out, L), out_bf.shape
    err = float(jnp.max(jnp.abs(out_bf - ref)))
    scale = float(jnp.max(jnp.abs(ref))) + 1.0
    assert err <= 0.03 * scale, ("bf16 mismatch (cfg 1)", err, scale)

    # Config 2: n_inputs == n_outputs -> identity residual, multi L-tile carry.
    N2, C2, L2, K2, D2 = 2, 8, 300, 3, 4
    x2 = jax.random.normal(kx2, (N2, C2, L2), jnp.float32)
    params2 = make_params(kp2, C2, C2, K2)
    ref2 = reference(x2, *params2, kernel_size=K2, dilation=D2)

    out2_f32 = jax.block_until_ready(
        temporal_block(x2, params2, kernel_size=K2, dilation=D2, tile_l=128,
                       compute_dtype=jnp.float32))
    assert out2_f32.shape == (N2, C2, L2), out2_f32.shape
    assert jnp.allclose(out2_f32, ref2, atol=1e-4, rtol=1e-4), "f32 mismatch (cfg 2)"

    out2_bf = jax.block_until_ready(
        temporal_block(x2, params2, kernel_size=K2, dilation=D2, tile_l=128))
    assert out2_bf.shape == (N2, C2, L2), out2_bf.shape
    err2 = float(jnp.max(jnp.abs(out2_bf - ref2)))
    scale2 = float(jnp.max(jnp.abs(ref2))) + 1.0
    assert err2 <= 0.03 * scale2, ("bf16 mismatch (cfg 2)", err2, scale2)

    print("KERNEL_OK")
</pallas_src>

<mosaic_0001>
module attributes {stable_mosaic.version = 11 : i64} {
  func.func @_temporal_block_kernel(%arg0: i32, %arg1: i32, %arg2: memref<1x8x128xf32, #tpu.memory_space<vmem>>, %arg3: memref<3x8x8xf32, #tpu.memory_space<vmem>>, %arg4: memref<8x1xf32, #tpu.memory_space<vmem>>, %arg5: memref<3x8x8xf32, #tpu.memory_space<vmem>>, %arg6: memref<8x1xf32, #tpu.memory_space<vmem>>, %arg7: memref<8x8xf32, #tpu.memory_space<vmem>>, %arg8: memref<8x1xf32, #tpu.memory_space<vmem>>, %arg9: memref<1x8x128xf32, #tpu.memory_space<vmem>>, %arg10: memref<8x256xf32, #tpu.memory_space<vmem>>, %arg11: memref<8x256xf32, #tpu.memory_space<vmem>>) attributes {dimension_semantics = [#tpu.dimension_semantics<parallel>, #tpu.dimension_semantics<arbitrary>], iteration_bounds = array<i64: 2, 1>, scalar_prefetch = 0 : i64, scratch_operands = 2 : i64, tpu.core_type = #tpu.core_type<tc>, window_params = [{transform_indices = @transform_0, window_bounds = array<i64: 1, 8, 128>}, {pipeline_mode = #tpu.pipeline_mode<synchronous>, transform_indices = @transform_1, window_bounds = array<i64: 3, 8, 8>}, {pipeline_mode = #tpu.pipeline_mode<synchronous>, transform_indices = @transform_2, window_bounds = array<i64: 8, 1>}, {pipeline_mode = #tpu.pipeline_mode<synchronous>, transform_indices = @transform_3, window_bounds = array<i64: 3, 8, 8>}, {pipeline_mode = #tpu.pipeline_mode<synchronous>, transform_indices = @transform_4, window_bounds = array<i64: 8, 1>}, {pipeline_mode = #tpu.pipeline_mode<synchronous>, transform_indices = @transform_5, window_bounds = array<i64: 8, 8>}, {pipeline_mode = #tpu.pipeline_mode<synchronous>, transform_indices = @transform_6, window_bounds = array<i64: 8, 1>}, {transform_indices = @transform_7, window_bounds = array<i64: 1, 8, 128>}]} {
    %c0_i32 = arith.constant 0 : i32
    %0 = arith.cmpi eq, %arg1, %c0_i32 : i32
    %1 = arith.extui %0 : i1 to i32
    %c0_i32_0 = arith.constant 0 : i32
    %2 = arith.cmpi ne, %1, %c0_i32_0 : i32
    scf.if %2 {
      %cst_57 = arith.constant 0.000000e+00 : f32
      %61 = vector.broadcast %cst_57 : f32 to vector<8x128xf32>
      %c0_58 = arith.constant 0 : index
      %c0_59 = arith.constant 0 : index
      %62 = vector.load %arg10[%c0_58, %c0_59] : memref<8x256xf32, #tpu.memory_space<vmem>>, vector<8x128xf32>
      tpu.vector_store %arg10[%c0_58, %c0_59], %61 {strides = array<i32>} : memref<8x256xf32, #tpu.memory_space<vmem>>, vector<8x128xf32>,
      %cst_60 = arith.constant 0.000000e+00 : f32
      %63 = vector.broadcast %cst_60 : f32 to vector<8x128xf32>
      %c0_61 = arith.constant 0 : index
      %c0_62 = arith.constant 0 : index
      %64 = vector.load %arg11[%c0_61, %c0_62] : memref<8x256xf32, #tpu.memory_space<vmem>>, vector<8x128xf32>
      tpu.vector_store %arg11[%c0_61, %c0_62], %63 {strides = array<i32>} : memref<8x256xf32, #tpu.memory_space<vmem>>, vector<8x128xf32>,
    } else {
    }
    %c0_i32_1 = arith.constant 0 : i32
    %3 = arith.cmpi sgt, %arg1, %c0_i32_1 : i32
    %4 = arith.extui %3 : i1 to i32
    %c0_i32_2 = arith.constant 0 : i32
    %5 = arith.cmpi ne, %4, %c0_i32_2 : i32
    scf.if %5 {
      %c0_57 = arith.constant 0 : index
      %c252 = arith.constant 252 : index
      %61 = vector.load %arg10[%c0_57, %c252] : memref<8x256xf32, #tpu.memory_space<vmem>>, vector<8x4xf32>
      %c0_58 = arith.constant 0 : index
      %c124_59 = arith.constant 124 : index
      %62 = vector.load %arg10[%c0_58, %c124_59] : memref<8x256xf32, #tpu.memory_space<vmem>>, vector<8x4xf32>
      tpu.vector_store %arg10[%c0_58, %c124_59], %61 {strides = array<i32>} : memref<8x256xf32, #tpu.memory_space<vmem>>, vector<8x4xf32>,
      %c0_60 = arith.constant 0 : index
      %c252_61 = arith.constant 252 : index
      %63 = vector.load %arg11[%c0_60, %c252_61] : memref<8x256xf32, #tpu.memory_space<vmem>>, vector<8x4xf32>
      %c0_62 = arith.constant 0 : index
      %c124_63 = arith.constant 124 : index
      %64 = vector.load %arg11[%c0_62, %c124_63] : memref<8x256xf32, #tpu.memory_space<vmem>>, vector<8x4xf32>
      tpu.vector_store %arg11[%c0_62, %c124_63], %63 {strides = array<i32>} : memref<8x256xf32, #tpu.memory_space<vmem>>, vector<8x4xf32>,
    } else {
    }
    %c0 = arith.constant 0 : index
    %c0_3 = arith.constant 0 : index
    %c0_4 = arith.constant 0 : index
    %6 = vector.load %arg2[%c0, %c0_3, %c0_4] : memref<1x8x128xf32, #tpu.memory_space<vmem>>, vector<1x8x128xf32>
    %7 = vector.shape_cast %6 : vector<1x8x128xf32> to vector<8x128xf32>
    %c0_5 = arith.constant 0 : index
    %c128 = arith.constant 128 : index
    %8 = vector.load %arg10[%c0_5, %c128] : memref<8x256xf32, #tpu.memory_space<vmem>>, vector<8x128xf32>
    tpu.vector_store %arg10[%c0_5, %c128], %7 {strides = array<i32>} : memref<8x256xf32, #tpu.memory_space<vmem>>, vector<8x128xf32>,
    %c0_6 = arith.constant 0 : index
    %c0_7 = arith.constant 0 : index
    %c0_8 = arith.constant 0 : index
    %9 = vector.load %arg3[%c0_6, %c0_7, %c0_8] : memref<3x8x8xf32, #tpu.memory_space<vmem>>, vector<1x8x8xf32>
    %10 = vector.shape_cast %9 : vector<1x8x8xf32> to vector<8x8xf32>
    %c0_9 = arith.constant 0 : index
    %c124 = arith.constant 124 : index
    %11 = vector.load %arg10[%c0_9, %c124] : memref<8x256xf32, #tpu.memory_space<vmem>>, vector<8x128xf32>
    %cst = arith.constant dense<0.000000e+00> : vector<8x128xf32>
    %12 = tpu.matmul %10, %11, %cst {dimension_numbers = #tpu.dot_dimension_numbers<[1], [0], [0], [1], [0, 0, 1, 1], [], []>} : vector<8x8xf32>, vector<8x128xf32>, vector<8x128xf32> -> vector<8x128xf32>
    %c1 = arith.constant 1 : index
    %c0_10 = arith.constant 0 : index
    %c0_11 = arith.constant 0 : index
    %13 = vector.load %arg3[%c1, %c0_10, %c0_11] : memref<3x8x8xf32, #tpu.memory_space<vmem>>, vector<1x8x8xf32>
    %14 = vector.shape_cast %13 : vector<1x8x8xf32> to vector<8x8xf32>
    %c0_12 = arith.constant 0 : index
    %c126 = arith.constant 126 : index
    %15 = vector.load %arg10[%c0_12, %c126] : memref<8x256xf32, #tpu.memory_space<vmem>>, vector<8x128xf32>
    %cst_13 = arith.constant dense<0.000000e+00> : vector<8x128xf32>
    %16 = tpu.matmul %14, %15, %cst_13 {dimension_numbers = #tpu.dot_dimension_numbers<[1], [0], [0], [1], [0, 0, 1, 1], [], []>} : vector<8x8xf32>, vector<8x128xf32>, vector<8x128xf32> -> vector<8x128xf32>
    %17 = arith.addf %12, %16 : vector<8x128xf32>
    %c2 = arith.constant 2 : index
    %c0_14 = arith.constant 0 : index
    %c0_15 = arith.constant 0 : index
    %18 = vector.load %arg3[%c2, %c0_14, %c0_15] : memref<3x8x8xf32, #tpu.memory_space<vmem>>, vector<1x8x8xf32>
    %19 = vector.shape_cast %18 : vector<1x8x8xf32> to vector<8x8xf32>
    %c0_16 = arith.constant 0 : index
    %c128_17 = arith.constant 128 : index
    %20 = vector.load %arg10[%c0_16, %c128_17] : memref<8x256xf32, #tpu.memory_space<vmem>>, vector<8x128xf32>
    %cst_18 = arith.constant dense<0.000000e+00> : vector<8x128xf32>
    %21 = tpu.matmul %19, %20, %cst_18 {dimension_numbers = #tpu.dot_dimension_numbers<[1], [0], [0], [1], [0, 0, 1, 1], [], []>} : vector<8x8xf32>, vector<8x128xf32>, vector<8x128xf32> -> vector<8x128xf32>
    %22 = arith.addf %17, %21 : vector<8x128xf32>
    %c0_19 = arith.constant 0 : index
    %c0_20 = arith.constant 0 : index
    %23 = vector.load %arg4[%c0_19, %c0_20] : memref<8x1xf32, #tpu.memory_space<vmem>>, vector<8x1xf32>
    %24 = vector.broadcast %23 : vector<8x1xf32> to vector<8x128xf32>
    %25 = arith.addf %22, %24 : vector<8x128xf32>
    %cst_21 = arith.constant 0.000000e+00 : f32
    %26 = vector.broadcast %cst_21 : f32 to vector<8x128xf32>
    %27 = arith.maximumf %25, %26 : vector<8x128xf32>
    %c0_22 = arith.constant 0 : index
    %c128_23 = arith.constant 128 : index
    %28 = vector.load %arg11[%c0_22, %c128_23] : memref<8x256xf32, #tpu.memory_space<vmem>>, vector<8x128xf32>
    tpu.vector_store %arg11[%c0_22, %c128_23], %27 {strides = array<i32>} : memref<8x256xf32, #tpu.memory_space<vmem>>, vector<8x128xf32>,
    %c0_24 = arith.constant 0 : index
    %c0_25 = arith.constant 0 : index
    %c0_26 = arith.constant 0 : index
    %29 = vector.load %arg5[%c0_24, %c0_25, %c0_26] : memref<3x8x8xf32, #tpu.memory_space<vmem>>, vector<1x8x8xf32>
    %30 = vector.shape_cast %29 : vector<1x8x8xf32> to vector<8x8xf32>
    %c0_27 = arith.constant 0 : index
    %c124_28 = arith.constant 124 : index
    %31 = vector.load %arg11[%c0_27, %c124_28] : memref<8x256xf32, #tpu.memory_space<vmem>>, vector<8x128xf32>
    %cst_29 = arith.constant dense<0.000000e+00> : vector<8x128xf32>
    %32 = tpu.matmul %30, %31, %cst_29 {dimension_numbers = #tpu.dot_dimension_numbers<[1], [0], [0], [1], [0, 0, 1, 1], [], []>} : vector<8x8xf32>, vector<8x128xf32>, vector<8x128xf32> -> vector<8x128xf32>
    %c1_30 = arith.constant 1 : index
    %c0_31 = arith.constant 0 : index
    %c0_32 = arith.constant 0 : index
    %33 = vector.load %arg5[%c1_30, %c0_31, %c0_32] : memref<3x8x8xf32, #tpu.memory_space<vmem>>, vector<1x8x8xf32>
    %34 = vector.shape_cast %33 : vector<1x8x8xf32> to vector<8x8xf32>
    %c0_33 = arith.constant 0 : index
    %c126_34 = arith.constant 126 : index
    %35 = vector.load %arg11[%c0_33, %c126_34] : memref<8x256xf32, #tpu.memory_space<vmem>>, vector<8x128xf32>
    %cst_35 = arith.constant dense<0.000000e+00> : vector<8x128xf32>
    %36 = tpu.matmul %34, %35, %cst_35 {dimension_numbers = #tpu.dot_dimension_numbers<[1], [0], [0], [1], [0, 0, 1, 1], [], []>} : vector<8x8xf32>, vector<8x128xf32>, vector<8x128xf32> -> vector<8x128xf32>
    %37 = arith.addf %32, %36 : vector<8x128xf32>
    %c2_36 = arith.constant 2 : index
    %c0_37 = arith.constant 0 : index
    %c0_38 = arith.constant 0 : index
    %38 = vector.load %arg5[%c2_36, %c0_37, %c0_38] : memref<3x8x8xf32, #tpu.memory_space<vmem>>, vector<1x8x8xf32>
    %39 = vector.shape_cast %38 : vector<1x8x8xf32> to vector<8x8xf32>
    %c0_39 = arith.constant 0 : index
    %c128_40 = arith.constant 128 : index
    %40 = vector.load %arg11[%c0_39, %c128_40] : memref<8x256xf32, #tpu.memory_space<vmem>>, vector<8x128xf32>
    %cst_41 = arith.constant dense<0.000000e+00> : vector<8x128xf32>
    %41 = tpu.matmul %39, %40, %cst_41 {dimension_numbers = #tpu.dot_dimension_numbers<[1], [0], [0], [1], [0, 0, 1, 1], [], []>} : vector<8x8xf32>, vector<8x128xf32>, vector<8x128xf32> -> vector<8x128xf32>
    %42 = arith.addf %37, %41 : vector<8x128xf32>
    %c0_42 = arith.constant 0 : index
    %c0_43 = arith.constant 0 : index
    %43 = vector.load %arg6[%c0_42, %c0_43] : memref<8x1xf32, #tpu.memory_space<vmem>>, vector<8x1xf32>
    %44 = vector.broadcast %43 : vector<8x1xf32> to vector<8x128xf32>
    %45 = arith.addf %42, %44 : vector<8x128xf32>
    %cst_44 = arith.constant 0.000000e+00 : f32
    %46 = vector.broadcast %cst_44 : f32 to vector<8x128xf32>
    %47 = arith.maximumf %45, %46 : vector<8x128xf32>
    %c0_45 = arith.constant 0 : index
    %c0_46 = arith.constant 0 : index
    %48 = vector.load %arg7[%c0_45, %c0_46] : memref<8x8xf32, #tpu.memory_space<vmem>>, vector<8x8xf32>
    %c0_47 = arith.constant 0 : index
    %c0_48 = arith.constant 0 : index
    %c0_49 = arith.constant 0 : index
    %49 = vector.load %arg2[%c0_47, %c0_48, %c0_49] : memref<1x8x128xf32, #tpu.memory_space<vmem>>, vector<1x8x128xf32>
    %50 = vector.shape_cast %49 : vector<1x8x128xf32> to vector<8x128xf32>
    %cst_50 = arith.constant dense<0.000000e+00> : vector<8x128xf32>
    %51 = tpu.matmul %48, %50, %cst_50 {dimension_numbers = #tpu.dot_dimension_numbers<[1], [0], [0], [1], [0, 0, 1, 1], [], []>} : vector<8x8xf32>, vector<8x128xf32>, vector<8x128xf32> -> vector<8x128xf32>
    %c0_51 = arith.constant 0 : index
    %c0_52 = arith.constant 0 : index
    %52 = vector.load %arg8[%c0_51, %c0_52] : memref<8x1xf32, #tpu.memory_space<vmem>>, vector<8x1xf32>
    %53 = vector.broadcast %52 : vector<8x1xf32> to vector<8x128xf32>
    %54 = arith.addf %51, %53 : vector<8x128xf32>
    %55 = arith.addf %47, %54 : vector<8x128xf32>
    %cst_53 = arith.constant 0.000000e+00 : f32
    %56 = vector.broadcast %cst_53 : f32 to vector<8x128xf32>
    %57 = arith.maximumf %55, %56 : vector<8x128xf32>
    %c0_54 = arith.constant 0 : index
    %c0_55 = arith.constant 0 : index
    %c0_56 = arith.constant 0 : index
    %58 = vector.load %arg9[%c0_54, %c0_55, %c0_56] : memref<1x8x128xf32, #tpu.memory_space<vmem>>, vector<1x8x128xf32>
    %59 = vector.shape_cast %58 : vector<1x8x128xf32> to vector<8x128xf32>
    %60 = vector.shape_cast %57 : vector<8x128xf32> to vector<1x8x128xf32>
    tpu.vector_store %arg9[%c0_54, %c0_55, %c0_56], %60 {strides = array<i32>} : memref<1x8x128xf32, #tpu.memory_space<vmem>>, vector<1x8x128xf32>,
    return
  }
  func.func @transform_0(%arg0: i32, %arg1: i32) -> (i32, i32, i32) {
    %c0_i32 = arith.constant 0 : i32
    %c0_i32_0 = arith.constant 0 : i32
    return %arg0, %c0_i32, %arg1 : i32, i32, i32
  }
  func.func @transform_1(%arg0: i32, %arg1: i32) -> (i32, i32, i32) {
    %c0_i32 = arith.constant 0 : i32
    %c0_i32_0 = arith.constant 0 : i32
    %c0_i32_1 = arith.constant 0 : i32
    %c0_i32_2 = arith.constant 0 : i32
    return %c0_i32, %c0_i32_0, %c0_i32_1 : i32, i32, i32
  }
  func.func @transform_2(%arg0: i32, %arg1: i32) -> (i32, i32) {
    %c0_i32 = arith.constant 0 : i32
    %c0_i32_0 = arith.constant 0 : i32
    %c0_i32_1 = arith.constant 0 : i32
    return %c0_i32, %c0_i32_0 : i32, i32
  }
  func.func @transform_3(%arg0: i32, %arg1: i32) -> (i32, i32, i32) {
    %c0_i32 = arith.constant 0 : i32
    %c0_i32_0 = arith.constant 0 : i32
    %c0_i32_1 = arith.constant 0 : i32
    %c0_i32_2 = arith.constant 0 : i32
    return %c0_i32, %c0_i32_0, %c0_i32_1 : i32, i32, i32
  }
  func.func @transform_4(%arg0: i32, %arg1: i32) -> (i32, i32) {
    %c0_i32 = arith.constant 0 : i32
    %c0_i32_0 = arith.constant 0 : i32
    %c0_i32_1 = arith.constant 0 : i32
    return %c0_i32, %c0_i32_0 : i32, i32
  }
  func.func @transform_5(%arg0: i32, %arg1: i32) -> (i32, i32) {
    %c0_i32 = arith.constant 0 : i32
    %c0_i32_0 = arith.constant 0 : i32
    %c0_i32_1 = arith.constant 0 : i32
    return %c0_i32, %c0_i32_0 : i32, i32
  }
  func.func @transform_6(%arg0: i32, %arg1: i32) -> (i32, i32) {
    %c0_i32 = arith.constant 0 : i32
    %c0_i32_0 = arith.constant 0 : i32
    %c0_i32_1 = arith.constant 0 : i32
    return %c0_i32, %c0_i32_0 : i32, i32
  }
  func.func @transform_7(%arg0: i32, %arg1: i32) -> (i32, i32, i32) {
    %c0_i32 = arith.constant 0 : i32
    %c0_i32_0 = arith.constant 0 : i32
    return %arg0, %c0_i32, %arg1 : i32, i32, i32
  }
}

</mosaic_0001>

<llo_original>
// kernel: tpu_custom_call.1
$region0: #{tpu_custom_call.1}
  #allocation0 [shape = 'u32[]', space=smem, size = 0x4, offset = 0x4, fixed_abs, tag = 'smem constant byte address 0x4 - core index']
  #allocation1 [shape = 'u32[144,128]{1,0:T(1,128)}', space=vmem, size = 0x12000, scoped, tag = 'internal scratch']
  #allocation2 [shape = 'f32[8,256]{1,0:T(8,128)}', space=vmem, size = 0x2000, scoped, tag = 'scratch operand']
  #allocation3 [shape = 'f32[8,256]{1,0:T(8,128)}', space=vmem, size = 0x2000, scoped, tag = 'scratch operand']
  %s0 = inlined_call_operand.hbm [shape: f32[2,8,128], index: 0, kind: input, shape index: {}]
  %s1 = inlined_call_operand.vmem [shape: f32[3,8,8], index: 1, kind: input, shape index: {}]
  %s2 = inlined_call_operand.vmem [shape: f32[8,1], index: 2, kind: input, shape index: {}]
  %s3 = inlined_call_operand.hbm [shape: f32[3,8,8], index: 3, kind: input, shape index: {}]
  %s4 = inlined_call_operand.vmem [shape: f32[8,1], index: 4, kind: input, shape index: {}]
  %s5 = inlined_call_operand.vmem [shape: f32[8,8], index: 5, kind: input, shape index: {}]
  %s6 = inlined_call_operand.vmem [shape: f32[8,1], index: 6, kind: input, shape index: {}]
  %s7 = inlined_call_operand.hbm [shape: f32[2,8,128], index: 7, kind: output, shape index: {}]
  %s8 = sld [smem:[#allocation0]]
  $region77: #{tpu_custom_call.1} parent=0
    _
  %s10 = ssub.s32 1, %s8
  %s11 = scalar_select 0, %s10, %s8
  $region1: #{tpu_custom_call.1} parent=0
    #allocation4 [shape = 'u8[8192]{0}', space=vmem, size = 0x2000, scoped, tag = 'input window, operand 0']
    #allocation5 [shape = 's32[2]{0}', space=sflag, size = 0x8, scoped, tag = 'scoped memory for tpu_custom_call.1']
    #allocation6 [shape = 's32[2]{0}', space=sflag, size = 0x8, scoped, tag = 'scoped memory for tpu_custom_call.1']
    #allocation7 [shape = 'u8[12288]{0}', space=vmem, size = 0x3000, scoped, tag = 'input window, operand 3, single buffered']
    #allocation8 [shape = 's32[1]{0}', space=sflag, size = 0x4, scoped, tag = 'scoped memory for tpu_custom_call.1']
    #allocation9 [shape = 'u8[8192]{0}', space=vmem, size = 0x2000, scoped, tag = 'output window, operand 0']
    %12 = vsyncpa [#allocation5], 0
    %s13 = scalar_lea.sflag [#allocation5], 1
    %14 = vsyncpa %s13, 0
    %15 = vsyncpa [#allocation8], 0
    %16 = vsyncpa [#allocation6], 0
    %s17 = scalar_lea.sflag [#allocation6], 1
    %18 = vsyncpa %s17, 0
    loop: start=0, step=1, limit=4
    $region2: #{tpu_custom_call.1} parent=1 // loop_pre_header
      _
    $region3: #{tpu_custom_call.1} parent=1 // loop_header
      %s20 = sphi 0, %s24
      %p21 = scmp.ge.s32.totalorder %s20, 4
      %s27 = sphi 0, %s39
      %s28 = sphi 0, %s35
      %s29 = sphi 0, %s27
      %s30 = sphi 0, %s28
      %s31 = sphi 0, %s29
      %s32 = sphi 0, %s30
      %s44 = sphi 0, %s46
      %s47 = sphi 0, %s44
      %s48 = sphi 0, %s47
      %s64 = sphi 0, %s48
      %s68 = sphi 0, %s68
      %s70 = sphi 0, %s68
      %s71 = sphi 0, %s70
      %s85 = sphi 0, %s71
      %s89 = sphi 0, %s89
      %s91 = sphi 0, %s89
      %s92 = sphi 0, %s91
      %s106 = sphi 0, %s92
      %s110 = sphi 0, %s110
      %s112 = sphi 0, %s110
      %s113 = sphi 0, %s112
      %s127 = sphi 0, %s113
      %s131 = sphi 0, %s131
      %s133 = sphi 0, %s131
      %s134 = sphi 0, %s133
      %s148 = sphi 0, %s134
      %s152 = sphi 0, %s152
      %s154 = sphi 0, %s152
      %s155 = sphi 0, %s154
      %s169 = sphi 0, %s155
      %s173 = sphi 0, %s173
      %s175 = sphi 0, %s173
      %s176 = sphi 0, %s175
      %s190 = sphi 0, %s176
      %s198 = sphi 0, %s200
      %s201 = sphi 0, %s198
      %s202 = sphi 0, %s201
      %s218 = sphi 0, %s202
    $region4: #{tpu_custom_call.1} parent=1 // loop_header_branch
      %23 = sbr.rel (%p21) target = $region8
    $region5: #{tpu_custom_call.1} parent=1 // loop_body
      %s25 = ssub.s32 %s20, 1
      %s26 = ssub.s32 %s20, 2
      %s33 = sadd.s32 1, %s28
      %p34 = scmp.ge.s32.totalorder %s33, 1
      %s35 = scalar_select %p34, 0, %s33
      %s36 = sadd.s32 1, %s27
      %s37 = scalar_select %p34, %s36, %s27
      %p38 = scmp.ge.s32.totalorder %s37, 2
      %s39 = scalar_select %p38, 0, %s37
      %s40 = ssub.s32 %s27, %s39
      %s41 = ssub.s32 %s28, %s35
      %s42 = sor.u32 %s40, %s41
      %p43 = scmp.eq.s32.totalorder %s42, 0
      %s45 = sadd.s32 %s44, 1
      %s46 = scalar_select %p43, %s44, %s45
      %p49 = pneg %p43
      %p50 = scmp.eq.s32.totalorder %s20, 1
      %p51 = por %p49, %p50
      %p52 = scmp.ne.s32.totalorder %s44, %s47
      %p53 = scmp.eq.s32.totalorder %s20, 0
      %p54 = por %p52, %p53
      %p55 = scmp.ne.s32.totalorder %s44, %s47
      %p56 = scmp.eq.s32.totalorder %s25, 1
      %p57 = por %p55, %p56
      %p58 = scmp.ne.s32.totalorder %s47, %s48
      %p59 = scmp.eq.s32.totalorder %s25, 0
      %p60 = por %p58, %p59
      %p61 = scmp.ne.s32.totalorder %s47, %s48
      %p62 = scmp.eq.s32.totalorder %s26, 1
      %p63 = por %p61, %p62
      %p65 = scmp.ne.s32.totalorder %s48, %s64
      %p66 = scmp.eq.s32.totalorder %s26, 0
      %p67 = por %p65, %p66
      %s69 = sadd.s32 %s68, 1
      %p72 = scmp.eq.s32.totalorder %s20, 1
      %p73 = scmp.ne.s32.totalorder %s68, %s70
      %p74 = scmp.eq.s32.totalorder %s20, 0
      %p75 = por %p73, %p74
      %p76 = scmp.ne.s32.totalorder %s68, %s70
      %p77 = scmp.eq.s32.totalorder %s25, 1
      %p78 = por %p76, %p77
      %p79 = scmp.ne.s32.totalorder %s70, %s71
      %p80 = scmp.eq.s32.totalorder %s25, 0
      %p81 = por %p79, %p80
      %p82 = scmp.ne.s32.totalorder %s70, %s71
      %p83 = scmp.eq.s32.totalorder %s26, 1
      %p84 = por %p82, %p83
      %p86 = scmp.ne.s32.totalorder %s71, %s85
      %p87 = scmp.eq.s32.totalorder %s26, 0
      %p88 = por %p86, %p87
      %s90 = sadd.s32 %s89, 1
      %p93 = scmp.eq.s32.totalorder %s20, 1
      %p94 = scmp.ne.s32.totalorder %s89, %s91
      %p95 = scmp.eq.s32.totalorder %s20, 0
      %p96 = por %p94, %p95
      %p97 = scmp.ne.s32.totalorder %s89, %s91
      %p98 = scmp.eq.s32.totalorder %s25, 1
      %p99 = por %p97, %p98
      %p100 = scmp.ne.s32.totalorder %s91, %s92
      %p101 = scmp.eq.s32.totalorder %s25, 0
      %p102 = por %p100, %p101
      %p103 = scmp.ne.s32.totalorder %s91, %s92
      %p104 = scmp.eq.s32.totalorder %s26, 1
      %p105 = por %p103, %p104
      %p107 = scmp.ne.s32.totalorder %s92, %s106
      %p108 = scmp.eq.s32.totalorder %s26, 0
      %p109 = por %p107, %p108
      %s111 = sadd.s32 %s110, 1
      %p114 = scmp.eq.s32.totalorder %s20, 1
      %p115 = scmp.ne.s32.totalorder %s110, %s112
      %p116 = scmp.eq.s32.totalorder %s20, 0
      %p117 = por %p115, %p116
      %p118 = scmp.ne.s32.totalorder %s110, %s112
      %p119 = scmp.eq.s32.totalorder %s25, 1
      %p120 = por %p118, %p119
      %p121 = scmp.ne.s32.totalorder %s112, %s113
      %p122 = scmp.eq.s32.totalorder %s25, 0
      %p123 = por %p121, %p122
      %p124 = scmp.ne.s32.totalorder %s112, %s113
      %p125 = scmp.eq.s32.totalorder %s26, 1
      %p126 = por %p124, %p125
      %p128 = scmp.ne.s32.totalorder %s113, %s127
      %p129 = scmp.eq.s32.totalorder %s26, 0
      %p130 = por %p128, %p129
      %s132 = sadd.s32 %s131, 1
      %p135 = scmp.eq.s32.totalorder %s20, 1
      %p136 = scmp.ne.s32.totalorder %s131, %s133
      %p137 = scmp.eq.s32.totalorder %s20, 0
      %p138 = por %p136, %p137
      %p139 = scmp.ne.s32.totalorder %s131, %s133
      %p140 = scmp.eq.s32.totalorder %s25, 1
      %p141 = por %p139, %p140
      %p142 = scmp.ne.s32.totalorder %s133, %s134
      %p143 = scmp.eq.s32.totalorder %s25, 0
      %p144 = por %p142, %p143
      %p145 = scmp.ne.s32.totalorder %s133, %s134
      %p146 = scmp.eq.s32.totalorder %s26, 1
      %p147 = por %p145, %p146
      %p149 = scmp.ne.s32.totalorder %s134, %s148
      %p150 = scmp.eq.s32.totalorder %s26, 0
      %p151 = por %p149, %p150
      %s153 = sadd.s32 %s152, 1
      %p156 = scmp.eq.s32.totalorder %s20, 1
      %p157 = scmp.ne.s32.totalorder %s152, %s154
      %p158 = scmp.eq.s32.totalorder %s20, 0
      %p159 = por %p157, %p158
      %p160 = scmp.ne.s32.totalorder %s152, %s154
      %p161 = scmp.eq.s32.totalorder %s25, 1
      %p162 = por %p160, %p161
      %p163 = scmp.ne.s32.totalorder %s154, %s155
      %p164 = scmp.eq.s32.totalorder %s25, 0
      %p165 = por %p163, %p164
      %p166 = scmp.ne.s32.totalorder %s154, %s155
      %p167 = scmp.eq.s32.totalorder %s26, 1
      %p168 = por %p166, %p167
      %p170 = scmp.ne.s32.totalorder %s155, %s169
      %p171 = scmp.eq.s32.totalorder %s26, 0
      %p172 = por %p170, %p171
      %s174 = sadd.s32 %s173, 1
      %p177 = scmp.eq.s32.totalorder %s20, 1
      %p178 = scmp.ne.s32.totalorder %s173, %s175
      %p179 = scmp.eq.s32.totalorder %s20, 0
      %p180 = por %p178, %p179
      %p181 = scmp.ne.s32.totalorder %s173, %s175
      %p182 = scmp.eq.s32.totalorder %s25, 1
      %p183 = por %p181, %p182
      %p184 = scmp.ne.s32.totalorder %s175, %s176
      %p185 = scmp.eq.s32.totalorder %s25, 0
      %p186 = por %p184, %p185
      %p187 = scmp.ne.s32.totalorder %s175, %s176
      %p188 = scmp.eq.s32.totalorder %s26, 1
      %p189 = por %p187, %p188
      %p191 = scmp.ne.s32.totalorder %s176, %s190
      %p192 = scmp.eq.s32.totalorder %s26, 0
      %p193 = por %p191, %p192
      %s194 = ssub.s32 %s27, %s39
      %s195 = ssub.s32 %s28, %s35
      %s196 = sor.u32 %s194, %s195
      %p197 = scmp.eq.s32.totalorder %s196, 0
      %s199 = sadd.s32 %s198, 1
      %s200 = scalar_select %p197, %s198, %s199
      %p203 = pneg %p197
      %p204 = scmp.eq.s32.totalorder %s20, 1
      %p205 = por %p203, %p204
      %p206 = scmp.ne.s32.totalorder %s198, %s201
      %p207 = scmp.eq.s32.totalorder %s20, 0
      %p208 = por %p206, %p207
      %p209 = scmp.ne.s32.totalorder %s198, %s201
      %p210 = scmp.eq.s32.totalorder %s25, 1
      %p211 = por %p209, %p210
      %p212 = scmp.ne.s32.totalorder %s201, %s202
      %p213 = scmp.eq.s32.totalorder %s25, 0
      %p214 = por %p212, %p213
      %p215 = scmp.ne.s32.totalorder %s201, %s202
      %p216 = scmp.eq.s32.totalorder %s26, 1
      %p217 = por %p215, %p216
      %p219 = scmp.ne.s32.totalorder %s202, %s218
      %p220 = scmp.eq.s32.totalorder %s26, 0
      %p221 = por %p219, %p220
      %p222 = scmp.le.s32.totalorder 1, %s20
      %p223 = scmp.lt.s32.totalorder %s20, 3
      %p224 = pnand %p222, %p223
      %p225 = pneg %p224
      // Predicated region
      $region9: #{tpu_custom_call.1} parent=5 // pred_check
        _
      $region10: #{tpu_custom_call.1} parent=5 // pred_check_branch
        %227 = sbr.rel (%p224) target = $region12
      $region11: #{tpu_custom_call.1} parent=5 // pred_region
        %s228 = ssub.s32 %s20, 1
        // Predicated region
        $region13: #{tpu_custom_call.1} parent=11 // pred_check
          %p229 = pneg %p81
        $region14: #{tpu_custom_call.1} parent=11 // pred_check_branch
          %231 = sbr.rel (%p229) target = $region16
        $region15: #{tpu_custom_call.1} parent=11 // pred_region
          _
        $region16: #{tpu_custom_call.1} parent=11 // pred_fallthru
          _
        // Predicated region
        $region17: #{tpu_custom_call.1} parent=11 // pred_check
          %p232 = pneg %p102
        $region18: #{tpu_custom_call.1} parent=11 // pred_check_branch
          %234 = sbr.rel (%p232) target = $region20
        $region19: #{tpu_custom_call.1} parent=11 // pred_region
          _
        $region20: #{tpu_custom_call.1} parent=11 // pred_fallthru
          _
        // Predicated region
        $region21: #{tpu_custom_call.1} parent=11 // pred_check
          %p235 = pneg %p123
        $region22: #{tpu_custom_call.1} parent=11 // pred_check_branch
          %237 = sbr.rel (%p235) target = $region24
        $region23: #{tpu_custom_call.1} parent=11 // pred_region
          %s239 = ssub.s32 384, 384
          %240 = vsyncadd [#allocation8], %s239
          %s241 = sshll.u32 [#allocation7], 4
          %s242 = int_to_ptr.vmem [resolvable:$true] %s241
          %247 = dma.hbm_to_vmem [thread:$0]  %s3, 384, %s242, [#allocation8], 128, 128, 8
        $region24: #{tpu_custom_call.1} parent=11 // pred_fallthru
          _
        // Predicated region
        $region25: #{tpu_custom_call.1} parent=11 // pred_check
          %p248 = pneg %p144
        $region26: #{tpu_custom_call.1} parent=11 // pred_check_branch
          %250 = sbr.rel (%p248) target = $region28
        $region27: #{tpu_custom_call.1} parent=11 // pred_region
          _
        $region28: #{tpu_custom_call.1} parent=11 // pred_fallthru
          _
        // Predicated region
        $region29: #{tpu_custom_call.1} parent=11 // pred_check
          %p251 = pneg %p165
        $region30: #{tpu_custom_call.1} parent=11 // pred_check_branch
          %253 = sbr.rel (%p251) target = $region32
        $region31: #{tpu_custom_call.1} parent=11 // pred_region
          _
        $region32: #{tpu_custom_call.1} parent=11 // pred_fallthru
          _
        // Predicated region
        $region33: #{tpu_custom_call.1} parent=11 // pred_check
          %p254 = pneg %p186
        $region34: #{tpu_custom_call.1} parent=11 // pred_check_branch
          %256 = sbr.rel (%p254) target = $region36
        $region35: #{tpu_custom_call.1} parent=11 // pred_region
          _
        $region36: #{tpu_custom_call.1} parent=11 // pred_fallthru
          _
      $region12: #{tpu_custom_call.1} parent=5 // pred_fallthru
        _
      %p257 = scmp.lt.s32.totalorder %s20, 2
      // Predicated region
      $region37: #{tpu_custom_call.1} parent=5 // pred_check
        %p258 = pneg %p257
      $region38: #{tpu_custom_call.1} parent=5 // pred_check_branch
        %260 = sbr.rel (%p258) target = $region40
      $region39: #{tpu_custom_call.1} parent=5 // pred_region
        // Predicated region
        $region41: #{tpu_custom_call.1} parent=39 // pred_check
          %p261 = pneg %p54
        $region42: #{tpu_custom_call.1} parent=39 // pred_check_branch
          %263 = sbr.rel (%p261) target = $region44
        $region43: #{tpu_custom_call.1} parent=39 // pred_region
          %s264 = sand.u32 %s44, 1
          %s265 = scalar_lea.sflag [#allocation5], %s264
          %s266 = sand.u32 %s44, 1
          %s267 = smul.addr %s266, 8
          %s268 = scalar_lea.vmem [#allocation4], %s267
          %s270 = ssub.s32 128, 128
          %271 = vsyncadd %s265, %s270
          %s272 = sadd.s32 %s28, %s27
          %s273 = smul.addr %s272, 128
          %s274 = scalar_lea.hbm %s0, %s273
          %s276 = sshll.u32 %s268, 4
          %s277 = int_to_ptr.vmem [resolvable:$true] %s276
          %279 = dma.hbm_to_vmem [thread:$0]  %s274, 128, %s277, %s265
        $region44: #{tpu_custom_call.1} parent=39 // pred_fallthru
          _
      $region40: #{tpu_custom_call.1} parent=5 // pred_fallthru
        _
      %p280 = scmp.le.s32.totalorder 1, %s20
      %p281 = scmp.lt.s32.totalorder %s20, 3
      %p282 = pnand %p280, %p281
      %p283 = pneg %p282
      // Predicated region
      $region45: #{tpu_custom_call.1} parent=5 // pred_check
        _
      $region46: #{tpu_custom_call.1} parent=5 // pred_check_branch
        %285 = sbr.rel (%p282) target = $region48
      $region47: #{tpu_custom_call.1} parent=5 // pred_region
        %s286 = ssub.s32 %s20, 1
        %s287 = sand.u32 %s47, 1
        %s288 = scalar_lea.sflag [#allocation5], %s287
        %s289 = sand.u32 %s47, 1
        %s290 = smul.addr %s289, 8
        %s291 = scalar_lea.vmem [#allocation4], %s290
        // Predicated region
        $region49: #{tpu_custom_call.1} parent=47 // pred_check
          %p292 = pneg %p60
        $region50: #{tpu_custom_call.1} parent=47 // pred_check_branch
          %294 = sbr.rel (%p292) target = $region52
        $region51: #{tpu_custom_call.1} parent=47 // pred_region
          %295 = dma.done %s288, 128
        $region52: #{tpu_custom_call.1} parent=47 // pred_fallthru
          _
        // Predicated region
        $region53: #{tpu_custom_call.1} parent=47 // pred_check
          %p296 = pneg %p123
        $region54: #{tpu_custom_call.1} parent=47 // pred_check_branch
          %298 = sbr.rel (%p296) target = $region56
        $region55: #{tpu_custom_call.1} parent=47 // pred_region
          %299 = dma.done [#allocation8], 384
        $region56: #{tpu_custom_call.1} parent=47 // pred_fallthru
          _
        %s300 = sand.u32 %s47, 1
        %s301 = scalar_lea.sflag [#allocation5], %s300
        %s302 = sand.u32 %s47, 1
        %s303 = smul.addr %s302, 8
        %s304 = scalar_lea.vmem [#allocation4], %s303
        %p305 = pneg %p60
        %p306 = pneg %p57
        %p307 = pneg %p81
        %p308 = pneg %p78
        %p309 = pneg %p102
        %p310 = pneg %p99
        %p311 = pneg %p123
        %p312 = pneg %p120
        %p313 = pneg %p144
        %p314 = pneg %p141
        %p315 = pneg %p165
        %p316 = pneg %p162
        %p317 = pneg %p186
        %p318 = pneg %p183
        %p319 = pneg %p214
        %p320 = pneg %p211
        %s321 = sand.u32 %s201, 1
        %s322 = scalar_lea.sflag [#allocation6], %s321
        %s323 = sand.u32 %s201, 1
        %s324 = smul.addr %s323, 8
        %s325 = scalar_lea.vmem [#allocation9], %s324
        %p326 = scmp.eq.s32.totalorder %s30, 0
        // Predicated region
        $region57: #{tpu_custom_call.1} parent=47 // pred_check
          %p327 = pneg %p326
        $region58: #{tpu_custom_call.1} parent=47 // pred_check_branch
          %329 = sbr.rel (%p327) target = $region60
        $region59: #{tpu_custom_call.1} parent=47 // pred_region
          %330 = vst [vmem:[#allocation2] sm:$0xff] 0.0
          %331 = vst [vmem:[#allocation3] sm:$0xff] 0.0
        $region60: #{tpu_custom_call.1} parent=47 // pred_fallthru
          _
        %p332 = scmp.gt.s32.totalorder %s30, 0
        // Predicated region
        $region61: #{tpu_custom_call.1} parent=47 // pred_check
          %p333 = pneg %p332
        $region62: #{tpu_custom_call.1} parent=47 // pred_check_branch
          %335 = sbr.rel (%p333) target = $region64
        $region63: #{tpu_custom_call.1} parent=47 // pred_region
          %v336 = vld [vmem:[#allocation2 + $0x8] sm:$0xff]
          %vm337 = vcmask 1048544
          %338 = vst.msk [vmem:[#allocation2] sm:$0xff] %vm337, %v336
          %v339 = vld [vmem:[#allocation3 + $0x8] sm:$0xff]
          %340 = vst.msk [vmem:[#allocation3] sm:$0xff] %vm337, %v339
        $region64: #{tpu_custom_call.1} parent=47 // pred_fallthru
          _
        %v341 = vld [vmem:[%s291] sm:$0xff]
        %342 = vst [vmem:[#allocation2 + $0x8] sm:$0xff] %v341
        %v343 = vld [vmem:[%s1] sm:$0xff]
        %v344 = vld [vmem:[#allocation2] sm:$0xff]
        %v345 = vld [vmem:[#allocation2 + $0x8] sm:$0xff]
        %s346 = scalar_lea.vmem %s1, 8
        %v347 = vld [vmem:[%s346] sm:$0xff]
        %350 = vrot.lane.b32.xlu0 %v344, 2
        %v351 = vpop.permute.xlu0 %350
        %352 = vrot.lane.b32.xlu0 %v345, 2
        %v353 = vpop.permute.xlu0 %352
        %vm354 = vcmask 15360
        %v355 = vsel %vm354, %v351, %v353
        %vm357 = vcmask 64512
        %v359 = vsel %vm357, %v347, 0
        %361 = vmatprep.subr.mxu0 0.0
        %362 = vmatpush1.msra.mxu0 %v355
        %363 = vmatprep.subr.mxu0 0.0
        %364 = vmatpush1.msra.mxu0 0.0
        %365 = vmatprep.subr.mxu0 0.0
        %366 = vmatpush1.msra.mxu0 0.0
        %367 = vmatprep.subr.mxu0 0.0
        %368 = vmatpush1.msra.mxu0 0.0
        %369 = vmatprep.subr.mxu0 0.0
        %370 = vmatpush1.msra.mxu0 0.0
        %371 = vmatprep.subr.mxu0 0.0
        %372 = vmatpush1.msra.mxu0 0.0
        %373 = vmatprep.subr.mxu0 0.0
        %374 = vmatpush1.msra.mxu0 0.0
        %375 = vmatprep.subr.mxu0 0.0
        %376 = vmatpush1.msra.mxu0 0.0
        %377 = vmatprep.subr.mxu0 0.0
        %378 = vmatpush1.msra.mxu0 0.0
        %379 = vmatprep.subr.mxu0 0.0
        %380 = vmatpush1.msra.mxu0 0.0
        %381 = vmatprep.subr.mxu0 0.0
        %382 = vmatpush1.msra.mxu0 0.0
        %383 = vmatprep.subr.mxu0 0.0
        %384 = vmatpush1.msra.mxu0 0.0
        %385 = vmatprep.subr.mxu0 0.0
        %386 = vmatpush1.msra.mxu0 0.0
        %387 = vmatprep.subr.mxu0 0.0
        %388 = vmatpush1.msra.mxu0 0.0
        %389 = vmatprep.subr.mxu0 0.0
        %390 = vmatpush1.msra.mxu0 0.0
        %391 = vmatprep.subr.mxu0 0.0
        %392 = vmatpush1.msra.mxu0 0.0
        %393 = vmatprep.subr.mxu0 0.0
        %394 = vmatpush1.msra.mxu0 0.0
        %395 = vmatprep.subr.mxu0 0.0
        %396 = vmatpush1.msra.mxu0 0.0
        %397 = vmatprep.subr.mxu0 0.0
        %398 = vmatpush1.msra.mxu0 0.0
        %399 = vmatprep.subr.mxu0 0.0
        %400 = vmatpush1.msra.mxu0 0.0
        %401 = vmatprep.subr.mxu0 0.0
        %402 = vmatpush1.msra.mxu0 0.0
        %403 = vmatprep.subr.mxu0 0.0
        %404 = vmatpush1.msra.mxu0 0.0
        %405 = vmatprep.subr.mxu0 0.0
        %406 = vmatpush1.msra.mxu0 0.0
        %407 = vmatprep.subr.mxu0 0.0
        %408 = vmatpush1.msra.mxu0 0.0
        %409 = vmatprep.subr.mxu0 0.0
        %410 = vmatpush1.msra.mxu0 0.0
        %411 = vmatprep.subr.mxu0 0.0
        %412 = vmatpush1.msra.mxu0 0.0
        %413 = vmatprep.subr.mxu0 0.0
        %414 = vmatpush1.msra.mxu0 0.0
        %415 = vmatprep.subr.mxu0 0.0
        %416 = vmatpush1.msra.mxu0 0.0
        %417 = vmatprep.subr.mxu0 0.0
        %418 = vmatpush1.msra.mxu0 0.0
        %419 = vmatprep.subr.mxu0 0.0
        %420 = vmatpush1.msra.mxu0 0.0
        %421 = vmatprep.subr.mxu0 0.0
        %422 = vmatpush1.msra.mxu0 0.0
        %423 = vmatprep.subr.mxu0 0.0
        %424 = vmatpush1.msra.mxu0 0.0
        %425 = vmatprep.mubr.f32.mxu0 0.0
        %426 = vmatmul.mubr.f32.gmra.mrb[0].mxu0 %v359
        %v427 = vpop.f32.mrb[0].mxu0
        %v428 = vadd.f32 0.0, %v427
        %v429 = vpop.f32.mrb[0].mxu0
        %430 = vdwg.mxu0
        %431 = vrot.lane.b32.xlu0 %v344, 4
        %v432 = vpop.permute.xlu0 %431
        %433 = vrot.lane.b32.xlu0 %v345, 4
        %v434 = vpop.permute.xlu0 %433
        %vm435 = vcmask 31744
        %v436 = vsel %vm435, %v432, %v434
        %v439 = vsel %vm357, %v343, 0
        %441 = vmatprep.subr.mxu0 0.0
        %442 = vmatpush1.msra.mxu0 %v436
        %443 = vmatprep.subr.mxu0 0.0
        %444 = vmatpush1.msra.mxu0 0.0
        %445 = vmatprep.subr.mxu0 0.0
        %446 = vmatpush1.msra.mxu0 0.0
        %447 = vmatprep.subr.mxu0 0.0
        %448 = vmatpush1.msra.mxu0 0.0
        %449 = vmatprep.subr.mxu0 0.0
        %450 = vmatpush1.msra.mxu0 0.0
        %451 = vmatprep.subr.mxu0 0.0
        %452 = vmatpush1.msra.mxu0 0.0
        %453 = vmatprep.subr.mxu0 0.0
        %454 = vmatpush1.msra.mxu0 0.0
        %455 = vmatprep.subr.mxu0 0.0
        %456 = vmatpush1.msra.mxu0 0.0
        %457 = vmatprep.subr.mxu0 0.0
        %458 = vmatpush1.msra.mxu0 0.0
        %459 = vmatprep.subr.mxu0 0.0
        %460 = vmatpush1.msra.mxu0 0.0
        %461 = vmatprep.subr.mxu0 0.0
        %462 = vmatpush1.msra.mxu0 0.0
        %463 = vmatprep.subr.mxu0 0.0
        %464 = vmatpush1.msra.mxu0 0.0
        %465 = vmatprep.subr.mxu0 0.0
        %466 = vmatpush1.msra.mxu0 0.0
        %467 = vmatprep.subr.mxu0 0.0
        %468 = vmatpush1.msra.mxu0 0.0
        %469 = vmatprep.subr.mxu0 0.0
        %470 = vmatpush1.msra.mxu0 0.0
        %471 = vmatprep.subr.mxu0 0.0
        %472 = vmatpush1.msra.mxu0 0.0
        %473 = vmatprep.subr.mxu0 0.0
        %474 = vmatpush1.msra.mxu0 0.0
        %475 = vmatprep.subr.mxu0 0.0
        %476 = vmatpush1.msra.mxu0 0.0
        %477 = vmatprep.subr.mxu0 0.0
        %478 = vmatpush1.msra.mxu0 0.0
        %479 = vmatprep.subr.mxu0 0.0
        %480 = vmatpush1.msra.mxu0 0.0
        %481 = vmatprep.subr.mxu0 0.0
        %482 = vmatpush1.msra.mxu0 0.0
        %483 = vmatprep.subr.mxu0 0.0
        %484 = vmatpush1.msra.mxu0 0.0
        %485 = vmatprep.subr.mxu0 0.0
        %486 = vmatpush1.msra.mxu0 0.0
        %487 = vmatprep.subr.mxu0 0.0
        %488 = vmatpush1.msra.mxu0 0.0
        %489 = vmatprep.subr.mxu0 0.0
        %490 = vmatpush1.msra.mxu0 0.0
        %491 = vmatprep.subr.mxu0 0.0
        %492 = vmatpush1.msra.mxu0 0.0
        %493 = vmatprep.subr.mxu0 0.0
        %494 = vmatpush1.msra.mxu0 0.0
        %495 = vmatprep.subr.mxu0 0.0
        %496 = vmatpush1.msra.mxu0 0.0
        %497 = vmatprep.subr.mxu0 0.0
        %498 = vmatpush1.msra.mxu0 0.0
        %499 = vmatprep.subr.mxu0 0.0
        %500 = vmatpush1.msra.mxu0 0.0
        %501 = vmatprep.subr.mxu0 0.0
        %502 = vmatpush1.msra.mxu0 0.0
        %503 = vmatprep.subr.mxu0 0.0
        %504 = vmatpush1.msra.mxu0 0.0
        %505 = vmatprep.mubr.f32.mxu0 0.0
        %506 = vmatmul.mubr.f32.gmra.mrb[0].mxu0 %v439
        %v507 = vpop.f32.mrb[0].mxu0
        %v508 = vadd.f32 %v428, %v507
        %v509 = vpop.f32.mrb[0].mxu0
        %510 = vdwg.mxu0
        %s511 = scalar_lea.vmem %s1, 16
        %v512 = vld [vmem:[%s511] sm:$0xff]
        %v514 = vsel %vm357, %v512, 0
        %516 = vmatprep.subr.mxu0 0.0
        %517 = vmatpush1.msra.mxu0 %v345
        %518 = vmatprep.subr.mxu0 0.0
        %519 = vmatpush1.msra.mxu0 0.0
        %520 = vmatprep.subr.mxu0 0.0
        %521 = vmatpush1.msra.mxu0 0.0
        %522 = vmatprep.subr.mxu0 0.0
        %523 = vmatpush1.msra.mxu0 0.0
        %524 = vmatprep.subr.mxu0 0.0
        %525 = vmatpush1.msra.mxu0 0.0
        %526 = vmatprep.subr.mxu0 0.0
        %527 = vmatpush1.msra.mxu0 0.0
        %528 = vmatprep.subr.mxu0 0.0
        %529 = vmatpush1.msra.mxu0 0.0
        %530 = vmatprep.subr.mxu0 0.0
        %531 = vmatpush1.msra.mxu0 0.0
        %532 = vmatprep.subr.mxu0 0.0
        %533 = vmatpush1.msra.mxu0 0.0
        %534 = vmatprep.subr.mxu0 0.0
        %535 = vmatpush1.msra.mxu0 0.0
        %536 = vmatprep.subr.mxu0 0.0
        %537 = vmatpush1.msra.mxu0 0.0
        %538 = vmatprep.subr.mxu0 0.0
        %539 = vmatpush1.msra.mxu0 0.0
        %540 = vmatprep.subr.mxu0 0.0
        %541 = vmatpush1.msra.mxu0 0.0
        %542 = vmatprep.subr.mxu0 0.0
        %543 = vmatpush1.msra.mxu0 0.0
        %544 = vmatprep.subr.mxu0 0.0
        %545 = vmatpush1.msra.mxu0 0.0
        %546 = vmatprep.subr.mxu0 0.0
        %547 = vmatpush1.msra.mxu0 0.0
        %548 = vmatprep.subr.mxu0 0.0
        %549 = vmatpush1.msra.mxu0 0.0
        %550 = vmatprep.subr.mxu0 0.0
        %551 = vmatpush1.msra.mxu0 0.0
        %552 = vmatprep.subr.mxu0 0.0
        %553 = vmatpush1.msra.mxu0 0.0
        %554 = vmatprep.subr.mxu0 0.0
        %555 = vmatpush1.msra.mxu0 0.0
        %556 = vmatprep.subr.mxu0 0.0
        %557 = vmatpush1.msra.mxu0 0.0
        %558 = vmatprep.subr.mxu0 0.0
        %559 = vmatpush1.msra.mxu0 0.0
        %560 = vmatprep.subr.mxu0 0.0
        %561 = vmatpush1.msra.mxu0 0.0
        %562 = vmatprep.subr.mxu0 0.0
        %563 = vmatpush1.msra.mxu0 0.0
        %564 = vmatprep.subr.mxu0 0.0
        %565 = vmatpush1.msra.mxu0 0.0
        %566 = vmatprep.subr.mxu0 0.0
        %567 = vmatpush1.msra.mxu0 0.0
        %568 = vmatprep.subr.mxu0 0.0
        %569 = vmatpush1.msra.mxu0 0.0
        %570 = vmatprep.subr.mxu0 0.0
        %571 = vmatpush1.msra.mxu0 0.0
        %572 = vmatprep.subr.mxu0 0.0
        %573 = vmatpush1.msra.mxu0 0.0
        %574 = vmatprep.subr.mxu0 0.0
        %575 = vmatpush1.msra.mxu0 0.0
        %576 = vmatprep.subr.mxu0 0.0
        %577 = vmatpush1.msra.mxu0 0.0
        %578 = vmatprep.subr.mxu0 0.0
        %579 = vmatpush1.msra.mxu0 0.0
        %580 = vmatprep.mubr.f32.mxu0 0.0
        %581 = vmatmul.mubr.f32.gmra.mrb[0].mxu0 %v514
        %v582 = vpop.f32.mrb[0].mxu0
        %v583 = vadd.f32 0.0, %v582
        %v584 = vpop.f32.mrb[0].mxu0
        %585 = vdwg.mxu0
        %v586 = vadd.f32 %v508, %v583
        %v587 = vld [vmem:[%s2] sm:$0xff]
        %589 = vset.pattern.permute.xlu0 0
        %590 = vperm.xlu0 %589, %v587
        %v591 = vpop.permute.xlu0 %590
        %v593 = vadd.f32 %v586, %v591
        %v594 = vmax.f32 %v593, 0.0
        %595 = vst [vmem:[#allocation3 + $0x8] sm:$0xff] %v594
        %v596 = vld [vmem:[#allocation7] sm:$0xff]
        %v597 = vld [vmem:[#allocation3] sm:$0xff]
        %v598 = vld [vmem:[#allocation3 + $0x8] sm:$0xff]
        %s599 = scalar_lea.vmem [#allocation7], 8
        %v600 = vld [vmem:[%s599] sm:$0xff]
        %603 = vrot.lane.b32.xlu0 %v597, 2
        %v604 = vpop.permute.xlu0 %603
        %605 = vrot.lane.b32.xlu0 %v598, 2
        %v606 = vpop.permute.xlu0 %605
        %v607 = vsel %vm354, %v604, %v606
        %v610 = vsel %vm357, %v600, 0
        %612 = vmatprep.subr.mxu0 0.0
        %613 = vmatpush1.msra.mxu0 %v607
        %614 = vmatprep.subr.mxu0 0.0
        %615 = vmatpush1.msra.mxu0 0.0
        %616 = vmatprep.subr.mxu0 0.0
        %617 = vmatpush1.msra.mxu0 0.0
        %618 = vmatprep.subr.mxu0 0.0
        %619 = vmatpush1.msra.mxu0 0.0
        %620 = vmatprep.subr.mxu0 0.0
        %621 = vmatpush1.msra.mxu0 0.0
        %622 = vmatprep.subr.mxu0 0.0
        %623 = vmatpush1.msra.mxu0 0.0
        %624 = vmatprep.subr.mxu0 0.0
        %625 = vmatpush1.msra.mxu0 0.0
        %626 = vmatprep.subr.mxu0 0.0
        %627 = vmatpush1.msra.mxu0 0.0
        %628 = vmatprep.subr.mxu0 0.0
        %629 = vmatpush1.msra.mxu0 0.0
        %630 = vmatprep.subr.mxu0 0.0
        %631 = vmatpush1.msra.mxu0 0.0
        %632 = vmatprep.subr.mxu0 0.0
        %633 = vmatpush1.msra.mxu0 0.0
        %634 = vmatprep.subr.mxu0 0.0
        %635 = vmatpush1.msra.mxu0 0.0
        %636 = vmatprep.subr.mxu0 0.0
        %637 = vmatpush1.msra.mxu0 0.0
        %638 = vmatprep.subr.mxu0 0.0
        %639 = vmatpush1.msra.mxu0 0.0
        %640 = vmatprep.subr.mxu0 0.0
        %641 = vmatpush1.msra.mxu0 0.0
        %642 = vmatprep.subr.mxu0 0.0
        %643 = vmatpush1.msra.mxu0 0.0
        %644 = vmatprep.subr.mxu0 0.0
        %645 = vmatpush1.msra.mxu0 0.0
        %646 = vmatprep.subr.mxu0 0.0
        %647 = vmatpush1.msra.mxu0 0.0
        %648 = vmatprep.subr.mxu0 0.0
        %649 = vmatpush1.msra.mxu0 0.0
        %650 = vmatprep.subr.mxu0 0.0
        %651 = vmatpush1.msra.mxu0 0.0
        %652 = vmatprep.subr.mxu0 0.0
        %653 = vmatpush1.msra.mxu0 0.0
        %654 = vmatprep.subr.mxu0 0.0
        %655 = vmatpush1.msra.mxu0 0.0
        %656 = vmatprep.subr.mxu0 0.0
        %657 = vmatpush1.msra.mxu0 0.0
        %658 = vmatprep.subr.mxu0 0.0
        %659 = vmatpush1.msra.mxu0 0.0
        %660 = vmatprep.subr.mxu0 0.0
        %661 = vmatpush1.msra.mxu0 0.0
        %662 = vmatprep.subr.mxu0 0.0
        %663 = vmatpush1.msra.mxu0 0.0
        %664 = vmatprep.subr.mxu0 0.0
        %665 = vmatpush1.msra.mxu0 0.0
        %666 = vmatprep.subr.mxu0 0.0
        %667 = vmatpush1.msra.mxu0 0.0
        %668 = vmatprep.subr.mxu0 0.0
        %669 = vmatpush1.msra.mxu0 0.0
        %670 = vmatprep.subr.mxu0 0.0
        %671 = vmatpush1.msra.mxu0 0.0
        %672 = vmatprep.subr.mxu0 0.0
        %673 = vmatpush1.msra.mxu0 0.0
        %674 = vmatprep.subr.mxu0 0.0
        %675 = vmatpush1.msra.mxu0 0.0
        %676 = vmatprep.mubr.f32.mxu0 0.0
        %677 = vmatmul.mubr.f32.gmra.mrb[0].mxu0 %v610
        %v678 = vpop.f32.mrb[0].mxu0
        %v679 = vadd.f32 0.0, %v678
        %v680 = vpop.f32.mrb[0].mxu0
        %681 = vdwg.mxu0
        %682 = vrot.lane.b32.xlu0 %v597, 4
        %v683 = vpop.permute.xlu0 %682
        %684 = vrot.lane.b32.xlu0 %v598, 4
        %v685 = vpop.permute.xlu0 %684
        %v686 = vsel %vm435, %v683, %v685
        %v689 = vsel %vm357, %v596, 0
        %691 = vmatprep.subr.mxu0 0.0
        %692 = vmatpush1.msra.mxu0 %v686
        %693 = vmatprep.subr.mxu0 0.0
        %694 = vmatpush1.msra.mxu0 0.0
        %695 = vmatprep.subr.mxu0 0.0
        %696 = vmatpush1.msra.mxu0 0.0
        %697 = vmatprep.subr.mxu0 0.0
        %698 = vmatpush1.msra.mxu0 0.0
        %699 = vmatprep.subr.mxu0 0.0
        %700 = vmatpush1.msra.mxu0 0.0
        %701 = vmatprep.subr.mxu0 0.0
        %702 = vmatpush1.msra.mxu0 0.0
        %703 = vmatprep.subr.mxu0 0.0
        %704 = vmatpush1.msra.mxu0 0.0
        %705 = vmatprep.subr.mxu0 0.0
        %706 = vmatpush1.msra.mxu0 0.0
        %707 = vmatprep.subr.mxu0 0.0
        %708 = vmatpush1.msra.mxu0 0.0
        %709 = vmatprep.subr.mxu0 0.0
        %710 = vmatpush1.msra.mxu0 0.0
        %711 = vmatprep.subr.mxu0 0.0
        %712 = vmatpush1.msra.mxu0 0.0
        %713 = vmatprep.subr.mxu0 0.0
        %714 = vmatpush1.msra.mxu0 0.0
        %715 = vmatprep.subr.mxu0 0.0
        %716 = vmatpush1.msra.mxu0 0.0
        %717 = vmatprep.subr.mxu0 0.0
        %718 = vmatpush1.msra.mxu0 0.0
        %719 = vmatprep.subr.mxu0 0.0
        %720 = vmatpush1.msra.mxu0 0.0
        %721 = vmatprep.subr.mxu0 0.0
        %722 = vmatpush1.msra.mxu0 0.0
        %723 = vmatprep.subr.mxu0 0.0
        %724 = vmatpush1.msra.mxu0 0.0
        %725 = vmatprep.subr.mxu0 0.0
        %726 = vmatpush1.msra.mxu0 0.0
        %727 = vmatprep.subr.mxu0 0.0
        %728 = vmatpush1.msra.mxu0 0.0
        %729 = vmatprep.subr.mxu0 0.0
        %730 = vmatpush1.msra.mxu0 0.0
        %731 = vmatprep.subr.mxu0 0.0
        %732 = vmatpush1.msra.mxu0 0.0
        %733 = vmatprep.subr.mxu0 0.0
        %734 = vmatpush1.msra.mxu0 0.0
        %735 = vmatprep.subr.mxu0 0.0
        %736 = vmatpush1.msra.mxu0 0.0
        %737 = vmatprep.subr.mxu0 0.0
        %738 = vmatpush1.msra.mxu0 0.0
        %739 = vmatprep.subr.mxu0 0.0
        %740 = vmatpush1.msra.mxu0 0.0
        %741 = vmatprep.subr.mxu0 0.0
        %742 = vmatpush1.msra.mxu0 0.0
        %743 = vmatprep.subr.mxu0 0.0
        %744 = vmatpush1.msra.mxu0 0.0
        %745 = vmatprep.subr.mxu0 0.0
        %746 = vmatpush1.msra.mxu0 0.0
        %747 = vmatprep.subr.mxu0 0.0
        %748 = vmatpush1.msra.mxu0 0.0
        %749 = vmatprep.subr.mxu0 0.0
        %750 = vmatpush1.msra.mxu0 0.0
        %751 = vmatprep.subr.mxu0 0.0
        %752 = vmatpush1.msra.mxu0 0.0
        %753 = vmatprep.subr.mxu0 0.0
        %754 = vmatpush1.msra.mxu0 0.0
        %755 = vmatprep.mubr.f32.mxu0 0.0
        %756 = vmatmul.mubr.f32.gmra.mrb[0].mxu0 %v689
        %v757 = vpop.f32.mrb[0].mxu0
        %v758 = vadd.f32 %v679, %v757
        %v759 = vpop.f32.mrb[0].mxu0
        %760 = vdwg.mxu0
        %s761 = scalar_lea.vmem [#allocation7], 16
        %v762 = vld [vmem:[%s761] sm:$0xff]
        %v764 = vsel %vm357, %v762, 0
        %766 = vmatprep.subr.mxu0 0.0
        %767 = vmatpush1.msra.mxu0 %v598
        %768 = vmatprep.subr.mxu0 0.0
        %769 = vmatpush1.msra.mxu0 0.0
        %770 = vmatprep.subr.mxu0 0.0
        %771 = vmatpush1.msra.mxu0 0.0
        %772 = vmatprep.subr.mxu0 0.0
        %773 = vmatpush1.msra.mxu0 0.0
        %774 = vmatprep.subr.mxu0 0.0
        %775 = vmatpush1.msra.mxu0 0.0
        %776 = vmatprep.subr.mxu0 0.0
        %777 = vmatpush1.msra.mxu0 0.0
        %778 = vmatprep.subr.mxu0 0.0
        %779 = vmatpush1.msra.mxu0 0.0
        %780 = vmatprep.subr.mxu0 0.0
        %781 = vmatpush1.msra.mxu0 0.0
        %782 = vmatprep.subr.mxu0 0.0
        %783 = vmatpush1.msra.mxu0 0.0
        %784 = vmatprep.subr.mxu0 0.0
        %785 = vmatpush1.msra.mxu0 0.0
        %786 = vmatprep.subr.mxu0 0.0
        %787 = vmatpush1.msra.mxu0 0.0
        %788 = vmatprep.subr.mxu0 0.0
        %789 = vmatpush1.msra.mxu0 0.0
        %790 = vmatprep.subr.mxu0 0.0
        %791 = vmatpush1.msra.mxu0 0.0
        %792 = vmatprep.subr.mxu0 0.0
        %793 = vmatpush1.msra.mxu0 0.0
        %794 = vmatprep.subr.mxu0 0.0
        %795 = vmatpush1.msra.mxu0 0.0
        %796 = vmatprep.subr.mxu0 0.0
        %797 = vmatpush1.msra.mxu0 0.0
        %798 = vmatprep.subr.mxu0 0.0
        %799 = vmatpush1.msra.mxu0 0.0
        %800 = vmatprep.subr.mxu0 0.0
        %801 = vmatpush1.msra.mxu0 0.0
        %802 = vmatprep.subr.mxu0 0.0
        %803 = vmatpush1.msra.mxu0 0.0
        %804 = vmatprep.subr.mxu0 0.0
        %805 = vmatpush1.msra.mxu0 0.0
        %806 = vmatprep.subr.mxu0 0.0
        %807 = vmatpush1.msra.mxu0 0.0
        %808 = vmatprep.subr.mxu0 0.0
        %809 = vmatpush1.msra.mxu0 0.0
        %810 = vmatprep.subr.mxu0 0.0
        %811 = vmatpush1.msra.mxu0 0.0
        %812 = vmatprep.subr.mxu0 0.0
        %813 = vmatpush1.msra.mxu0 0.0
        %814 = vmatprep.subr.mxu0 0.0
        %815 = vmatpush1.msra.mxu0 0.0
        %816 = vmatprep.subr.mxu0 0.0
        %817 = vmatpush1.msra.mxu0 0.0
        %818 = vmatprep.subr.mxu0 0.0
        %819 = vmatpush1.msra.mxu0 0.0
        %820 = vmatprep.subr.mxu0 0.0
        %821 = vmatpush1.msra.mxu0 0.0
        %822 = vmatprep.subr.mxu0 0.0
        %823 = vmatpush1.msra.mxu0 0.0
        %824 = vmatprep.subr.mxu0 0.0
        %825 = vmatpush1.msra.mxu0 0.0
        %826 = vmatprep.subr.mxu0 0.0
        %827 = vmatpush1.msra.mxu0 0.0
        %828 = vmatprep.subr.mxu0 0.0
        %829 = vmatpush1.msra.mxu0 0.0
        %830 = vmatprep.mubr.f32.mxu0 0.0
        %831 = vmatmul.mubr.f32.gmra.mrb[0].mxu0 %v764
        %v832 = vpop.f32.mrb[0].mxu0
        %v833 = vadd.f32 0.0, %v832
        %v834 = vpop.f32.mrb[0].mxu0
        %835 = vdwg.mxu0
        %v836 = vadd.f32 %v758, %v833
        %v837 = vld [vmem:[%s4] sm:$0xff]
        %839 = vset.pattern.permute.xlu0 0
        %840 = vperm.xlu0 %839, %v837
        %v841 = vpop.permute.xlu0 %840
        %v843 = vadd.f32 %v836, %v841
        %v844 = vmax.f32 %v843, 0.0
        %v845 = vld [vmem:[%s5] sm:$0xff]
        %v846 = vld [vmem:[%s291] sm:$0xff]
        %v847 = vld [vmem:[%s6] sm:$0xff]
        %849 = vset.pattern.permute.xlu0 0
        %850 = vperm.xlu0 %849, %v847
        %v851 = vpop.permute.xlu0 %850
        %v854 = vsel %vm357, %v845, 0
        %856 = vmatprep.subr.mxu0 0.0
        %857 = vmatpush1.msra.mxu0 %v846
        %858 = vmatprep.subr.mxu0 0.0
        %859 = vmatpush1.msra.mxu0 0.0
        %860 = vmatprep.subr.mxu0 0.0
        %861 = vmatpush1.msra.mxu0 0.0
        %862 = vmatprep.subr.mxu0 0.0
        %863 = vmatpush1.msra.mxu0 0.0
        %864 = vmatprep.subr.mxu0 0.0
        %865 = vmatpush1.msra.mxu0 0.0
        %866 = vmatprep.subr.mxu0 0.0
        %867 = vmatpush1.msra.mxu0 0.0
        %868 = vmatprep.subr.mxu0 0.0
        %869 = vmatpush1.msra.mxu0 0.0
        %870 = vmatprep.subr.mxu0 0.0
        %871 = vmatpush1.msra.mxu0 0.0
        %872 = vmatprep.subr.mxu0 0.0
        %873 = vmatpush1.msra.mxu0 0.0
        %874 = vmatprep.subr.mxu0 0.0
        %875 = vmatpush1.msra.mxu0 0.0
        %876 = vmatprep.subr.mxu0 0.0
        %877 = vmatpush1.msra.mxu0 0.0
        %878 = vmatprep.subr.mxu0 0.0
        %879 = vmatpush1.msra.mxu0 0.0
        %880 = vmatprep.subr.mxu0 0.0
        %881 = vmatpush1.msra.mxu0 0.0
        %882 = vmatprep.subr.mxu0 0.0
        %883 = vmatpush1.msra.mxu0 0.0
        %884 = vmatprep.subr.mxu0 0.0
        %885 = vmatpush1.msra.mxu0 0.0
        %886 = vmatprep.subr.mxu0 0.0
        %887 = vmatpush1.msra.mxu0 0.0
        %888 = vmatprep.subr.mxu0 0.0
        %889 = vmatpush1.msra.mxu0 0.0
        %890 = vmatprep.subr.mxu0 0.0
        %891 = vmatpush1.msra.mxu0 0.0
        %892 = vmatprep.subr.mxu0 0.0
        %893 = vmatpush1.msra.mxu0 0.0
        %894 = vmatprep.subr.mxu0 0.0
        %895 = vmatpush1.msra.mxu0 0.0
        %896 = vmatprep.subr.mxu0 0.0
        %897 = vmatpush1.msra.mxu0 0.0
        %898 = vmatprep.subr.mxu0 0.0
        %899 = vmatpush1.msra.mxu0 0.0
        %900 = vmatprep.subr.mxu0 0.0
        %901 = vmatpush1.msra.mxu0 0.0
        %902 = vmatprep.subr.mxu0 0.0
        %903 = vmatpush1.msra.mxu0 0.0
        %904 = vmatprep.subr.mxu0 0.0
        %905 = vmatpush1.msra.mxu0 0.0
        %906 = vmatprep.subr.mxu0 0.0
        %907 = vmatpush1.msra.mxu0 0.0
        %908 = vmatprep.subr.mxu0 0.0
        %909 = vmatpush1.msra.mxu0 0.0
        %910 = vmatprep.subr.mxu0 0.0
        %911 = vmatpush1.msra.mxu0 0.0
        %912 = vmatprep.subr.mxu0 0.0
        %913 = vmatpush1.msra.mxu0 0.0
        %914 = vmatprep.subr.mxu0 0.0
        %915 = vmatpush1.msra.mxu0 0.0
        %916 = vmatprep.subr.mxu0 0.0
        %917 = vmatpush1.msra.mxu0 0.0
        %918 = vmatprep.subr.mxu0 0.0
        %919 = vmatpush1.msra.mxu0 0.0
        %920 = vmatprep.mubr.f32.mxu0 0.0
        %921 = vmatmul.mubr.f32.gmra.mrb[0].mxu0 %v854
        %v922 = vpop.f32.mrb[0].mxu0
        %v923 = vadd.f32 %v851, %v922
        %v924 = vpop.f32.mrb[0].mxu0
        %925 = vdwg.mxu0
        %v926 = vadd.f32 %v844, %v923
        %v927 = vmax.f32 %v926, 0.0
        %928 = vst [vmem:[%s325] sm:$0xff] %v927
        %s929 = sand.u32 %s201, 1
        %s930 = scalar_lea.sflag [#allocation6], %s929
        %s931 = sand.u32 %s201, 1
        %s932 = smul.addr %s931, 8
        %s933 = scalar_lea.vmem [#allocation9], %s932
        // Predicated region
        $region65: #{tpu_custom_call.1} parent=47 // pred_check
          %p934 = pneg %p211
        $region66: #{tpu_custom_call.1} parent=47 // pred_check_branch
          %936 = sbr.rel (%p934) target = $region68
        $region67: #{tpu_custom_call.1} parent=47 // pred_region
          %s938 = ssub.s32 128, 128
          %939 = vsyncadd %s930, %s938
          %s940 = sadd.s32 %s30, %s29
          %s941 = smul.addr %s940, 128
          %s942 = scalar_lea.hbm %s7, %s941
          %s944 = sshll.u32 %s933, 4
          %s945 = int_to_ptr.vmem [resolvable:$true] %s944
          %947 = dma.vmem_to_hbm [thread:$0]  %s945, 128, %s942, %s930
        $region68: #{tpu_custom_call.1} parent=47 // pred_fallthru
          _
      $region48: #{tpu_custom_call.1} parent=5 // pred_fallthru
        _
      %p948 = scmp.le.s32.totalorder 2, %s20
      // Predicated region
      $region69: #{tpu_custom_call.1} parent=5 // pred_check
        %p949 = pneg %p948
      $region70: #{tpu_custom_call.1} parent=5 // pred_check_branch
        %951 = sbr.rel (%p949) target = $region72
      $region71: #{tpu_custom_call.1} parent=5 // pred_region
        %s952 = ssub.s32 %s20, 2
        // Predicated region
        $region73: #{tpu_custom_call.1} parent=71 // pred_check
          %p953 = pneg %p217
        $region74: #{tpu_custom_call.1} parent=71 // pred_check_branch
          %955 = sbr.rel (%p953) target = $region76
        $region75: #{tpu_custom_call.1} parent=71 // pred_region
          %s956 = sand.u32 %s202, 1
          %s957 = scalar_lea.sflag [#allocation6], %s956
          %s958 = sand.u32 %s202, 1
          %s959 = smul.addr %s958, 8
          %s960 = scalar_lea.vmem [#allocation9], %s959
          %961 = dma.done %s957, 128
        $region76: #{tpu_custom_call.1} parent=71 // pred_fallthru
          _
      $region72: #{tpu_custom_call.1} parent=5 // pred_fallthru
        _
    $region6: #{tpu_custom_call.1} parent=1 // loop_footer
      %s24 = sadd.s32 1, %s20
    $region7: #{tpu_custom_call.1} parent=1 // loop_footer_branch
      %19 = sbr.rel target = $region3
    $region8: #{tpu_custom_call.1} parent=1 // loop_exit
      _
    %962 = vsyncpa [#allocation5], 1
    %s963 = scalar_lea.sflag [#allocation5], 1
    %964 = vsyncpa %s963, 1
    %965 = vsyncpa [#allocation8], 1
    %966 = vsyncpa [#allocation6], 1
    %s967 = scalar_lea.sflag [#allocation6], 1
    %968 = vsyncpa %s967, 1

</llo_original>
